<compile_context>
chip_gen: v6e
topology: v6e:2x2x1
jax: 0.10.0
libtpu: 0.0.40
codegen_flags: <defaults>
</compile_context>

<pallas_src>
import functools

import jax
import jax.numpy as jnp
from jax.experimental import pallas as pl
from jax.experimental.pallas import tpu as pltpu


def _pick_spatial_tile(hw, max_elems=4096):
    """Largest lane-dense tile (multiple of 128) that divides hw, else hw."""
    if hw <= max_elems:
        return hw
    t = (max_elems // 128) * 128
    while t >= 128:
        if hw % t == 0:
            return t
        t -= 128
    return hw


def _pick_channel_tile(c, max_c):
    """Largest multiple-of-8 tile that divides c (or c itself)."""
    if c <= max_c:
        return c
    t = (max_c // 8) * 8
    while t >= 8:
        if c % t == 0:
            return t
        t -= 8
    return c


# ---------------------------------------------------------------------------
# Pass 1: channel max / mean pooling on the lane-flat (B, C, H*W) view.
# ---------------------------------------------------------------------------
def _pool_kernel(x_ref, pooled_ref, *, tc, inv_c):
    c_idx = pl.program_id(2)
    n_c = pl.num_programs(2)

    # Single streamed pass over the channel tile in 8-row chunks:
    # only the running max / running sum stay live.
    step = 8 if (tc % 8 == 0 and tc > 8) else tc
    xr = x_ref[0, 0:step, :].astype(jnp.float32)
    cmax = jnp.max(xr, axis=0)
    csum = jnp.sum(xr, axis=0)
    for r0 in range(step, tc, step):
        xr = x_ref[0, r0:r0 + step, :].astype(jnp.float32)
        cmax = jnp.maximum(cmax, jnp.max(xr, axis=0))
        csum = csum + jnp.sum(xr, axis=0)

    @pl.when(c_idx == 0)
    def _():
        pooled_ref[0, 0, :] = cmax
        pooled_ref[0, 1, :] = csum

    @pl.when(c_idx > 0)
    def _():
        pooled_ref[0, 0, :] = jnp.maximum(pooled_ref[0, 0, :], cmax)
        pooled_ref[0, 1, :] = pooled_ref[0, 1, :] + csum

    @pl.when(c_idx == n_c - 1)
    def _():
        pooled_ref[0, 1, :] = pooled_ref[0, 1, :] * inv_c


# ---------------------------------------------------------------------------
# Pass 2: tiny per-batch 2->1 KxK "same" conv + sigmoid.
# ---------------------------------------------------------------------------
def _conv_sigmoid_kernel(params_ref, pooled_ref, att_ref, pad_ref, *, H, W, K):
    p = (K - 1) // 2

    # Zero-padded pooled maps. Re-zeroed every step on purpose: the scratch is
    # per-core under megacore grid partitioning, and this buffer is touched
    # only once per batch element, so the memset is negligible.
    pad_ref[...] = jnp.zeros_like(pad_ref)
    pad_ref[0, p:p + H, p:p + W] = pooled_ref[0, 0, :, :]
    pad_ref[1, p:p + H, p:p + W] = pooled_ref[0, 1, :, :]

    # Static shifted-sum MACs; conv weights read as scalars from SMEM.
    acc = jnp.zeros((H, W), jnp.float32)
    for ci in range(2):
        for ki in range(K):
            for kj in range(K):
                w = params_ref[ci * K * K + ki * K + kj]
                acc = acc + w * pad_ref[ci, ki:ki + H, kj:kj + W]
    bias = params_ref[2 * K * K]
    att_ref[0, :, :] = jax.nn.sigmoid(acc + bias)


# ---------------------------------------------------------------------------
# Pass 3: broadcast the attention map across C with lane-dense stores.
# ---------------------------------------------------------------------------
def _broadcast_kernel(att_ref, o_ref, *, tc, ts):
    a = att_ref[0, 0, :]                                    # (ts,)
    chunk = 8 if (tc % 8 == 0 and tc >= 8) else tc
    # One broadcast, hoisted out of the store loop; 8-sublane-wide stores.
    blk = jnp.broadcast_to(a[None, :], (chunk, ts)).astype(o_ref.dtype)
    for c0 in range(0, tc, chunk):
        o_ref[0, c0:c0 + chunk, :] = blk


def spatial_attention(x, conv_weight, conv_bias, kernel_size):
    """x: (B, C, H, W); conv_weight: (1, 2, K, K); conv_bias: (1,)."""
    B, C, H, W = x.shape
    K = kernel_size
    assert K % 2 == 1, "Odd kernel size required"
    HW = H * W

    ts = _pick_spatial_tile(HW)            # lane-dense spatial tile
    tc_pool = _pick_channel_tile(C, 128)   # ~<=2 MiB input block for pass 1
    tc_bcast = _pick_channel_tile(C, 64)   # ~<=1 MiB output block for pass 3

    # -------- Pass 1: channel pooling on the lane-flat view ---------------
    x_flat = x.reshape(B, C, HW)           # contiguous -> free reshape
    pooled = pl.pallas_call(
        functools.partial(_pool_kernel, tc=tc_pool, inv_c=1.0 / C),
        out_shape=jax.ShapeDtypeStruct((B, 2, HW), jnp.float32),
        grid=(B, HW // ts, C // tc_pool),
        in_specs=[pl.BlockSpec((1, tc_pool, ts), lambda b, s, c: (b, c, s))],
        out_specs=pl.BlockSpec((1, 2, ts), lambda b, s, c: (b, 0, s)),
        compiler_params=pltpu.CompilerParams(
            dimension_semantics=("parallel", "parallel", "arbitrary")),
    )(x_flat)

    # -------- Pass 2: tiny per-batch KxK conv + sigmoid --------------------
    params = jnp.concatenate(
        [conv_weight.reshape(-1).astype(jnp.float32),
         conv_bias.reshape(-1).astype(jnp.float32)])
    pooled_2d = pooled.reshape(B, 2, H, W)
    att = pl.pallas_call(
        functools.partial(_conv_sigmoid_kernel, H=H, W=W, K=K),
        out_shape=jax.ShapeDtypeStruct((B, H, W), jnp.float32),
        grid=(B,),
        in_specs=[
            pl.BlockSpec(memory_space=pltpu.MemorySpace.SMEM),       # params
            pl.BlockSpec((1, 2, H, W), lambda b: (b, 0, 0, 0)),      # pooled
        ],
        out_specs=pl.BlockSpec((1, H, W), lambda b: (b, 0, 0)),
        scratch_shapes=[pltpu.VMEM((2, H + K - 1, W + K - 1), jnp.float32)],
        compiler_params=pltpu.CompilerParams(
            dimension_semantics=("parallel",)),
    )(params, pooled_2d)

    # -------- Pass 3: broadcast att across C (the big, store-bound pass) ---
    att_flat = att.reshape(B, 1, HW)
    out_flat = pl.pallas_call(
        functools.partial(_broadcast_kernel, tc=tc_bcast, ts=ts),
        out_shape=jax.ShapeDtypeStruct((B, C, HW), x.dtype),
        grid=(B, C // tc_bcast, HW // ts),
        in_specs=[pl.BlockSpec((1, 1, ts), lambda b, c, s: (b, 0, s))],
        out_specs=pl.BlockSpec((1, tc_bcast, ts), lambda b, c, s: (b, c, s)),
        compiler_params=pltpu.CompilerParams(
            dimension_semantics=("parallel", "parallel", "parallel")),
    )(att_flat)

    return out_flat.reshape(B, C, H, W)


def _reference(x, conv_weight, conv_bias, kernel_size):
    """Pure-JAX reference matching PyTorch semantics."""
    B, C, H, W = x.shape
    K = kernel_size
    p = (K - 1) // 2
    max_pool = jnp.max(x, axis=1)    # (B, H, W)
    avg_pool = jnp.mean(x, axis=1)   # (B, H, W)
    pool = jnp.stack([max_pool, avg_pool], axis=1)          # (B, 2, H, W)
    pool_pad = jnp.pad(pool, ((0, 0), (0, 0), (p, p), (p, p)))
    acc = jnp.zeros((B, H, W), jnp.float32)
    for ci in range(2):
        for ki in range(K):
            for kj in range(K):
                acc = acc + conv_weight[0, ci, ki, kj] * \
                    pool_pad[:, ci, ki:ki + H, kj:kj + W]
    conv = acc + conv_bias[0]
    att = jax.nn.sigmoid(conv)[:, None, :, :]
    return jnp.broadcast_to(att, (B, C, H, W))


if __name__ == "__main__":
    B, C, H, W = 2, 4, 16, 16
    kernel_size = 3

    key = jax.random.PRNGKey(0)
    kx, kw, kb = jax.random.split(key, 3)

    x = jax.random.normal(kx, (B, C, H, W), dtype=jnp.float32)

    # Deterministic synthetic init for nn.Conv2d(2, 1, k, padding=(k-1)//2)
    fan_in = 2 * kernel_size * kernel_size
    bound = 1.0 / jnp.sqrt(fan_in)
    conv_weight = jax.random.uniform(
        kw, (1, 2, kernel_size, kernel_size), jnp.float32, -bound, bound)
    conv_bias = jax.random.uniform(kb, (1,), jnp.float32, -bound, bound)

    out = spatial_attention(x, conv_weight, conv_bias, kernel_size)
    out = jax.block_until_ready(out)

    ref = _reference(x, conv_weight, conv_bias, kernel_size)
    assert out.shape == (B, C, H, W)
    assert jnp.max(jnp.abs(out - ref)) < 1e-5, "mismatch vs reference"

    print("KERNEL_OK")
</pallas_src>

<mosaic_0001>
module attributes {stable_mosaic.version = 11 : i64} {
  func.func @_pool_kernel(%arg0: i32, %arg1: i32, %arg2: i32, %arg3: memref<1x4x256xf32, #tpu.memory_space<vmem>>, %arg4: memref<1x2x256xf32, #tpu.memory_space<vmem>>) attributes {dimension_semantics = [#tpu.dimension_semantics<parallel>, #tpu.dimension_semantics<parallel>, #tpu.dimension_semantics<arbitrary>], iteration_bounds = array<i64: 2, 1, 1>, scalar_prefetch = 0 : i64, scratch_operands = 0 : i64, tpu.core_type = #tpu.core_type<tc>, window_params = [{transform_indices = @transform_0, window_bounds = array<i64: 1, 4, 256>}, {transform_indices = @transform_1, window_bounds = array<i64: 1, 2, 256>}]} {
    %c0 = arith.constant 0 : index
    %c0_0 = arith.constant 0 : index
    %c0_1 = arith.constant 0 : index
    %0 = vector.load %arg3[%c0, %c0_0, %c0_1] : memref<1x4x256xf32, #tpu.memory_space<vmem>>, vector<1x4x256xf32>
    %1 = vector.shape_cast %0 : vector<1x4x256xf32> to vector<4x256xf32>
    %cst = arith.constant dense<0xFF800000> : vector<256xf32>
    %2 = vector.multi_reduction <maximumf>, %1, %cst [0] : vector<4x256xf32> to vector<256xf32>
    %cst_2 = arith.constant dense<0.000000e+00> : vector<256xf32>
    %3 = vector.multi_reduction <add>, %1, %cst_2 [0] : vector<4x256xf32> to vector<256xf32>
    %c0_i32 = arith.constant 0 : i32
    %4 = arith.cmpi eq, %arg2, %c0_i32 : i32
    %5 = arith.extui %4 : i1 to i32
    %c0_i32_3 = arith.constant 0 : i32
    %6 = arith.cmpi ne, %5, %c0_i32_3 : i32
    scf.if %6 {
      %c0_8 = arith.constant 0 : index
      %c0_9 = arith.constant 0 : index
      %c0_10 = arith.constant 0 : index
      %13 = vector.load %arg4[%c0_8, %c0_9, %c0_10] : memref<1x2x256xf32, #tpu.memory_space<vmem>>, vector<1x1x256xf32>
      %14 = vector.shape_cast %13 : vector<1x1x256xf32> to vector<256xf32>
      %15 = vector.shape_cast %2 : vector<256xf32> to vector<1x1x256xf32>
      tpu.vector_store %arg4[%c0_8, %c0_9, %c0_10], %15 {strides = array<i32>} : memref<1x2x256xf32, #tpu.memory_space<vmem>>, vector<1x1x256xf32>,
      %c0_11 = arith.constant 0 : index
      %c1 = arith.constant 1 : index
      %c0_12 = arith.constant 0 : index
      %16 = vector.load %arg4[%c0_11, %c1, %c0_12] : memref<1x2x256xf32, #tpu.memory_space<vmem>>, vector<1x1x256xf32>
      %17 = vector.shape_cast %16 : vector<1x1x256xf32> to vector<256xf32>
      %18 = vector.shape_cast %3 : vector<256xf32> to vector<1x1x256xf32>
      tpu.vector_store %arg4[%c0_11, %c1, %c0_12], %18 {strides = array<i32>} : memref<1x2x256xf32, #tpu.memory_space<vmem>>, vector<1x1x256xf32>,
    } else {
    }
    %c0_i32_4 = arith.constant 0 : i32
    %7 = arith.cmpi sgt, %arg2, %c0_i32_4 : i32
    %8 = arith.extui %7 : i1 to i32
    %c0_i32_5 = arith.constant 0 : i32
    %9 = arith.cmpi ne, %8, %c0_i32_5 : i32
    scf.if %9 {
      %c0_8 = arith.constant 0 : index
      %c0_9 = arith.constant 0 : index
      %c0_10 = arith.constant 0 : index
      %13 = vector.load %arg4[%c0_8, %c0_9, %c0_10] : memref<1x2x256xf32, #tpu.memory_space<vmem>>, vector<1x1x256xf32>
      %14 = vector.shape_cast %13 : vector<1x1x256xf32> to vector<256xf32>
      %15 = arith.maximumf %14, %2 : vector<256xf32>
      %c0_11 = arith.constant 0 : index
      %c0_12 = arith.constant 0 : index
      %c0_13 = arith.constant 0 : index
      %16 = vector.load %arg4[%c0_11, %c0_12, %c0_13] : memref<1x2x256xf32, #tpu.memory_space<vmem>>, vector<1x1x256xf32>
      %17 = vector.shape_cast %16 : vector<1x1x256xf32> to vector<256xf32>
      %18 = vector.shape_cast %15 : vector<256xf32> to vector<1x1x256xf32>
      tpu.vector_store %arg4[%c0_11, %c0_12, %c0_13], %18 {strides = array<i32>} : memref<1x2x256xf32, #tpu.memory_space<vmem>>, vector<1x1x256xf32>,
      %c0_14 = arith.constant 0 : index
      %c1 = arith.constant 1 : index
      %c0_15 = arith.constant 0 : index
      %19 = vector.load %arg4[%c0_14, %c1, %c0_15] : memref<1x2x256xf32, #tpu.memory_space<vmem>>, vector<1x1x256xf32>
      %20 = vector.shape_cast %19 : vector<1x1x256xf32> to vector<256xf32>
      %21 = arith.addf %20, %3 : vector<256xf32>
      %c0_16 = arith.constant 0 : index
      %c1_17 = arith.constant 1 : index
      %c0_18 = arith.constant 0 : index
      %22 = vector.load %arg4[%c0_16, %c1_17, %c0_18] : memref<1x2x256xf32, #tpu.memory_space<vmem>>, vector<1x1x256xf32>
      %23 = vector.shape_cast %22 : vector<1x1x256xf32> to vector<256xf32>
      %24 = vector.shape_cast %21 : vector<256xf32> to vector<1x1x256xf32>
      tpu.vector_store %arg4[%c0_16, %c1_17, %c0_18], %24 {strides = array<i32>} : memref<1x2x256xf32, #tpu.memory_space<vmem>>, vector<1x1x256xf32>,
    } else {
    }
    %c0_i32_6 = arith.constant 0 : i32
    %10 = arith.cmpi eq, %arg2, %c0_i32_6 : i32
    %11 = arith.extui %10 : i1 to i32
    %c0_i32_7 = arith.constant 0 : i32
    %12 = arith.cmpi ne, %11, %c0_i32_7 : i32
    scf.if %12 {
      %c0_8 = arith.constant 0 : index
      %c1 = arith.constant 1 : index
      %c0_9 = arith.constant 0 : index
      %13 = vector.load %arg4[%c0_8, %c1, %c0_9] : memref<1x2x256xf32, #tpu.memory_space<vmem>>, vector<1x1x256xf32>
      %14 = vector.shape_cast %13 : vector<1x1x256xf32> to vector<256xf32>
      %cst_10 = arith.constant 2.500000e-01 : f32
      %15 = vector.broadcast %cst_10 : f32 to vector<256xf32>
      %16 = arith.mulf %14, %15 : vector<256xf32>
      %c0_11 = arith.constant 0 : index
      %c1_12 = arith.constant 1 : index
      %c0_13 = arith.constant 0 : index
      %17 = vector.load %arg4[%c0_11, %c1_12, %c0_13] : memref<1x2x256xf32, #tpu.memory_space<vmem>>, vector<1x1x256xf32>
      %18 = vector.shape_cast %17 : vector<1x1x256xf32> to vector<256xf32>
      %19 = vector.shape_cast %16 : vector<256xf32> to vector<1x1x256xf32>
      tpu.vector_store %arg4[%c0_11, %c1_12, %c0_13], %19 {strides = array<i32>} : memref<1x2x256xf32, #tpu.memory_space<vmem>>, vector<1x1x256xf32>,
    } else {
    }
    return
  }
  func.func @transform_0(%arg0: i32, %arg1: i32, %arg2: i32) -> (i32, i32, i32) {
    %c0_i32 = arith.constant 0 : i32
    return %arg0, %arg2, %arg1 : i32, i32, i32
  }
  func.func @transform_1(%arg0: i32, %arg1: i32, %arg2: i32) -> (i32, i32, i32) {
    %c0_i32 = arith.constant 0 : i32
    %c0_i32_0 = arith.constant 0 : i32
    return %arg0, %c0_i32, %arg1 : i32, i32, i32
  }
}

</mosaic_0001>

<llo_original>
// kernel: tpu_custom_call.1
$region0: #{tpu_custom_call.1}
  #allocation0 [shape = 'u32[]', space=smem, size = 0x4, offset = 0x4, fixed_abs, tag = 'smem constant byte address 0x4 - core index']
  #allocation1 [shape = 'u32[144,128]{1,0:T(1,128)}', space=vmem, size = 0x12000, scoped, tag = 'internal scratch']
  %s0 = inlined_call_operand.hbm [shape: f32[2,4,256], index: 0, kind: input, shape index: {}]
  %s1 = inlined_call_operand.hbm [shape: f32[2,2,256], index: 1, kind: output, shape index: {}]
  %s2 = sld [smem:[#allocation0]]
  $region53: #{tpu_custom_call.1} parent=0
    _
  %s4 = ssub.s32 1, %s2
  %s5 = scalar_select 0, %s4, %s2
  $region1: #{tpu_custom_call.1} parent=0
    #allocation2 [shape = 'u8[8192]{0}', space=vmem, size = 0x2000, scoped, tag = 'input window, operand 0']
    #allocation3 [shape = 's32[2]{0}', space=sflag, size = 0x8, scoped, tag = 'scoped memory for tpu_custom_call.1']
    #allocation4 [shape = 's32[2]{0}', space=sflag, size = 0x8, scoped, tag = 'scoped memory for tpu_custom_call.1']
    #allocation5 [shape = 'u8[4096]{0}', space=vmem, size = 0x1000, scoped, tag = 'output window, operand 0']
    %6 = vsyncpa [#allocation3], 0
    %s7 = scalar_lea.sflag [#allocation3], 1
    %8 = vsyncpa %s7, 0
    %9 = vsyncpa [#allocation4], 0
    %s10 = scalar_lea.sflag [#allocation4], 1
    %11 = vsyncpa %s10, 0
    loop: start=0, step=1, limit=4
    $region2: #{tpu_custom_call.1} parent=1 // loop_pre_header
      _
    $region3: #{tpu_custom_call.1} parent=1 // loop_header
      %s13 = sphi 0, %s17
      %p14 = scmp.ge.s32.totalorder %s13, 4
      %s20 = sphi 0, %s39
      %s21 = sphi 0, %s35
      %s22 = sphi 0, %s31
      %s23 = sphi 0, %s20
      %s24 = sphi 0, %s21
      %s25 = sphi 0, %s22
      %s26 = sphi 0, %s23
      %s27 = sphi 0, %s24
      %s28 = sphi 0, %s25
      %s46 = sphi 0, %s48
      %s49 = sphi 0, %s46
      %s50 = sphi 0, %s49
      %s66 = sphi 0, %s50
      %s74 = sphi 0, %s76
      %s77 = sphi 0, %s74
      %s78 = sphi 0, %s77
      %s94 = sphi 0, %s78
    $region4: #{tpu_custom_call.1} parent=1 // loop_header_branch
      %16 = sbr.rel (%p14) target = $region8
    $region5: #{tpu_custom_call.1} parent=1 // loop_body
      %s18 = ssub.s32 %s13, 1
      %s19 = ssub.s32 %s13, 2
      %s29 = sadd.s32 1, %s22
      %p30 = scmp.ge.s32.totalorder %s29, 1
      %s31 = scalar_select %p30, 0, %s29
      %s32 = sadd.s32 1, %s21
      %s33 = scalar_select %p30, %s32, %s21
      %p34 = scmp.ge.s32.totalorder %s33, 1
      %s35 = scalar_select %p34, 0, %s33
      %s36 = sadd.s32 1, %s20
      %s37 = scalar_select %p34, %s36, %s20
      %p38 = scmp.ge.s32.totalorder %s37, 2
      %s39 = scalar_select %p38, 0, %s37
      %s40 = ssub.s32 %s20, %s39
      %s41 = ssub.s32 %s22, %s31
      %s42 = sor.u32 %s40, %s41
      %s43 = ssub.s32 %s21, %s35
      %s44 = sor.u32 %s42, %s43
      %p45 = scmp.eq.s32.totalorder %s44, 0
      %s47 = sadd.s32 %s46, 1
      %s48 = scalar_select %p45, %s46, %s47
      %p51 = pneg %p45
      %p52 = scmp.eq.s32.totalorder %s13, 1
      %p53 = por %p51, %p52
      %p54 = scmp.ne.s32.totalorder %s46, %s49
      %p55 = scmp.eq.s32.totalorder %s13, 0
      %p56 = por %p54, %p55
      %p57 = scmp.ne.s32.totalorder %s46, %s49
      %p58 = scmp.eq.s32.totalorder %s18, 1
      %p59 = por %p57, %p58
      %p60 = scmp.ne.s32.totalorder %s49, %s50
      %p61 = scmp.eq.s32.totalorder %s18, 0
      %p62 = por %p60, %p61
      %p63 = scmp.ne.s32.totalorder %s49, %s50
      %p64 = scmp.eq.s32.totalorder %s19, 1
      %p65 = por %p63, %p64
      %p67 = scmp.ne.s32.totalorder %s50, %s66
      %p68 = scmp.eq.s32.totalorder %s19, 0
      %p69 = por %p67, %p68
      %s70 = ssub.s32 %s20, %s39
      %s71 = ssub.s32 %s21, %s35
      %s72 = sor.u32 %s70, %s71
      %p73 = scmp.eq.s32.totalorder %s72, 0
      %s75 = sadd.s32 %s74, 1
      %s76 = scalar_select %p73, %s74, %s75
      %p79 = pneg %p73
      %p80 = scmp.eq.s32.totalorder %s13, 1
      %p81 = por %p79, %p80
      %p82 = scmp.ne.s32.totalorder %s74, %s77
      %p83 = scmp.eq.s32.totalorder %s13, 0
      %p84 = por %p82, %p83
      %p85 = scmp.ne.s32.totalorder %s74, %s77
      %p86 = scmp.eq.s32.totalorder %s18, 1
      %p87 = por %p85, %p86
      %p88 = scmp.ne.s32.totalorder %s77, %s78
      %p89 = scmp.eq.s32.totalorder %s18, 0
      %p90 = por %p88, %p89
      %p91 = scmp.ne.s32.totalorder %s77, %s78
      %p92 = scmp.eq.s32.totalorder %s19, 1
      %p93 = por %p91, %p92
      %p95 = scmp.ne.s32.totalorder %s78, %s94
      %p96 = scmp.eq.s32.totalorder %s19, 0
      %p97 = por %p95, %p96
      %p98 = scmp.le.s32.totalorder 1, %s13
      %p99 = scmp.lt.s32.totalorder %s13, 3
      %p100 = pnand %p98, %p99
      %p101 = pneg %p100
      // Predicated region
      $region9: #{tpu_custom_call.1} parent=5 // pred_check
        _
      $region10: #{tpu_custom_call.1} parent=5 // pred_check_branch
        %103 = sbr.rel (%p100) target = $region12
      $region11: #{tpu_custom_call.1} parent=5 // pred_region
        %s104 = ssub.s32 %s13, 1
      $region12: #{tpu_custom_call.1} parent=5 // pred_fallthru
        _
      %p105 = scmp.lt.s32.totalorder %s13, 2
      // Predicated region
      $region13: #{tpu_custom_call.1} parent=5 // pred_check
        %p106 = pneg %p105
      $region14: #{tpu_custom_call.1} parent=5 // pred_check_branch
        %108 = sbr.rel (%p106) target = $region16
      $region15: #{tpu_custom_call.1} parent=5 // pred_region
        // Predicated region
        $region17: #{tpu_custom_call.1} parent=15 // pred_check
          %p109 = pneg %p56
        $region18: #{tpu_custom_call.1} parent=15 // pred_check_branch
          %111 = sbr.rel (%p109) target = $region20
        $region19: #{tpu_custom_call.1} parent=15 // pred_region
          %s112 = sand.u32 %s46, 1
          %s113 = scalar_lea.sflag [#allocation3], %s112
          %s114 = sand.u32 %s46, 1
          %s115 = smul.addr %s114, 8
          %s116 = scalar_lea.vmem [#allocation2], %s115
          %s117 = smul.u32 2, %s21
          %s119 = ssub.s32 128, 128
          %120 = vsyncadd %s113, %s119
          %s121 = smul.addr %s22, 2
          %s122 = sadd.s32 %s117, %s121
          %s123 = smul.addr %s20, 2
          %s124 = sadd.s32 %s122, %s123
          %s125 = smul.addr %s124, 64
          %s126 = scalar_lea.hbm %s0, %s125
          %s128 = sshll.u32 %s116, 4
          %s129 = int_to_ptr.vmem [resolvable:$true] %s128
          %131 = dma.hbm_to_vmem [thread:$0]  %s126, 128, %s129, %s113
        $region20: #{tpu_custom_call.1} parent=15 // pred_fallthru
          _
      $region16: #{tpu_custom_call.1} parent=5 // pred_fallthru
        _
      %p132 = scmp.le.s32.totalorder 1, %s13
      %p133 = scmp.lt.s32.totalorder %s13, 3
      %p134 = pnand %p132, %p133
      %p135 = pneg %p134
      // Predicated region
      $region21: #{tpu_custom_call.1} parent=5 // pred_check
        _
      $region22: #{tpu_custom_call.1} parent=5 // pred_check_branch
        %137 = sbr.rel (%p134) target = $region24
      $region23: #{tpu_custom_call.1} parent=5 // pred_region
        %s138 = ssub.s32 %s13, 1
        %s139 = sand.u32 %s49, 1
        %s140 = scalar_lea.sflag [#allocation3], %s139
        %s141 = sand.u32 %s49, 1
        %s142 = smul.addr %s141, 8
        %s143 = scalar_lea.vmem [#allocation2], %s142
        // Predicated region
        $region25: #{tpu_custom_call.1} parent=23 // pred_check
          %p144 = pneg %p62
        $region26: #{tpu_custom_call.1} parent=23 // pred_check_branch
          %146 = sbr.rel (%p144) target = $region28
        $region27: #{tpu_custom_call.1} parent=23 // pred_region
          %147 = dma.done %s140, 128
        $region28: #{tpu_custom_call.1} parent=23 // pred_fallthru
          _
        %s148 = sand.u32 %s49, 1
        %s149 = scalar_lea.sflag [#allocation3], %s148
        %s150 = sand.u32 %s49, 1
        %s151 = smul.addr %s150, 8
        %s152 = scalar_lea.vmem [#allocation2], %s151
        %p153 = pneg %p62
        %p154 = pneg %p59
        %p155 = pneg %p90
        %p156 = pneg %p87
        %s157 = sand.u32 %s77, 1
        %s158 = scalar_lea.sflag [#allocation4], %s157
        %s159 = sand.u32 %s77, 1
        %s160 = smul.addr %s159, 4
        %s161 = scalar_lea.vmem [#allocation5], %s160
        %s162 = smul.u32 2, %s24
        %s163 = smul.u32 2, %s24
        %v164 = vld [vmem:[%s143] sm:$0xff]
        %v166 = vcombine.high %v164, %v164
        %vm168 = vcmask 1043456
        %v169 = vsel %vm168, %v164, -inf
        %v170 = vrot.slane %v169, 4
        %v171 = vmax.f32 %v169, %v170
        %v172 = vrot.slane %v171, 2
        %v173 = vmax.f32 %v171, %v172
        %v174 = vrot.slane %v173, 1
        %v175 = vmax.f32 %v173, %v174
        %v176 = vsel %vm168, %v166, -inf
        %v177 = vrot.slane %v176, 4
        %v178 = vmax.f32 %v176, %v177
        %v179 = vrot.slane %v178, 2
        %v180 = vmax.f32 %v178, %v179
        %v181 = vrot.slane %v180, 1
        %v182 = vmax.f32 %v180, %v181
        %v183 = vsel %vm168, %v164, 0.0
        %v184 = vrot.slane %v183, 4
        %v185 = vadd.f32 %v183, %v184
        %v186 = vrot.slane %v185, 2
        %v187 = vadd.f32 %v185, %v186
        %v188 = vrot.slane %v187, 1
        %v189 = vadd.f32 %v187, %v188
        %v190 = vsel %vm168, %v166, 0.0
        %v191 = vrot.slane %v190, 4
        %v192 = vadd.f32 %v190, %v191
        %v193 = vrot.slane %v192, 2
        %v194 = vadd.f32 %v192, %v193
        %v195 = vrot.slane %v194, 1
        %v196 = vadd.f32 %v194, %v195
        %p197 = scmp.eq.s32.totalorder %s25, 0
        // Predicated region
        $region29: #{tpu_custom_call.1} parent=23 // pred_check
          %p198 = pneg %p197
        $region30: #{tpu_custom_call.1} parent=23 // pred_check_branch
          %200 = sbr.rel (%p198) target = $region32
        $region31: #{tpu_custom_call.1} parent=23 // pred_region
          %v203 = vcombine.low %v175, %v182
          %v205 = vunpack.c.l.s4 1966171168
          %v206 = vunpack.c.0.s8 %v205
          %v207 = vlaneseq
          %v208 = vshrl.u32 %v207, 7
          %v209 = vsub.s32 %v206, %v208
          %v210 = vrot.slane %v203, %v209
          %v212 = vunpack.c.l.s4 1966171168
          %v213 = vunpack.c.0.s8 %v212
          %v214 = vlaneseq
          %v215 = vshrl.u32 %v214, 7
          %v216 = vsub.s32 %v213, %v215
          %v217 = vrot.slane %v210, %v216
          %v219 = vlaneseq
          %vm220 = vcmp.ge.s32.totalorder %v219, 0
          %vm221 = vcmp.lt.s32.totalorder %v219, 256
          %vm222 = vmand %vm220, %vm221
          %223 = vst.msk [vmem:[%s161] ss:$2 sm:$0x3] %vm222, %v217
          %v226 = vcombine.low %v189, %v196
          %v228 = vunpack.c.l.s4 1966171168
          %v229 = vunpack.c.0.s8 %v228
          %v230 = vlaneseq
          %v231 = vshrl.u32 %v230, 7
          %v232 = vsub.s32 %v229, %v231
          %v233 = vrot.slane %v226, %v232
          %v235 = vunpack.c.l.s4 1966171168
          %v236 = vunpack.c.0.s8 %v235
          %v237 = vlaneseq
          %v238 = vshrl.u32 %v237, 7
          %v239 = vsub.s32 %v236, %v238
          %v240 = vrot.slane %v233, %v239
          %s242 = scalar_lea.vmem %s161, 1 [#allocation5]
          %243 = vst.msk [vmem:[%s242] ss:$2 sm:$0x3] %vm222, %v240
        $region32: #{tpu_custom_call.1} parent=23 // pred_fallthru
          _
        %p244 = scmp.gt.s32.totalorder %s25, 0
        // Predicated region
        $region33: #{tpu_custom_call.1} parent=23 // pred_check
          %p245 = pneg %p244
        $region34: #{tpu_custom_call.1} parent=23 // pred_check_branch
          %247 = sbr.rel (%p245) target = $region36
        $region35: #{tpu_custom_call.1} parent=23 // pred_region
          %v248 = vld [vmem:[%s161] ss:$2 sm:$0x3]
          %v251 = vcombine.low %v175, %v182
          %v253 = vunpack.c.l.s4 1966171168
          %v254 = vunpack.c.0.s8 %v253
          %v255 = vlaneseq
          %v256 = vshrl.u32 %v255, 7
          %v257 = vsub.s32 %v254, %v256
          %v258 = vrot.slane %v251, %v257
          %v260 = vunpack.c.l.s4 1966171168
          %v261 = vunpack.c.0.s8 %v260
          %v262 = vlaneseq
          %v263 = vshrl.u32 %v262, 7
          %v264 = vsub.s32 %v261, %v263
          %v265 = vrot.slane %v258, %v264
          %v267 = vmax.f32 %v248, %v265
          %v268 = vlaneseq
          %vm269 = vcmp.ge.s32.totalorder %v268, 0
          %vm270 = vcmp.lt.s32.totalorder %v268, 256
          %vm271 = vmand %vm269, %vm270
          %272 = vst.msk [vmem:[%s161] ss:$2 sm:$0x3] %vm271, %v267
          %s273 = scalar_lea.vmem %s161, 1 [#allocation5]
          %v274 = vld [vmem:[%s273] ss:$2 sm:$0x3]
          %v277 = vcombine.low %v189, %v196
          %v279 = vunpack.c.l.s4 1966171168
          %v280 = vunpack.c.0.s8 %v279
          %v281 = vlaneseq
          %v282 = vshrl.u32 %v281, 7
          %v283 = vsub.s32 %v280, %v282
          %v284 = vrot.slane %v277, %v283
          %v286 = vunpack.c.l.s4 1966171168
          %v287 = vunpack.c.0.s8 %v286
          %v288 = vlaneseq
          %v289 = vshrl.u32 %v288, 7
          %v290 = vsub.s32 %v287, %v289
          %v291 = vrot.slane %v284, %v290
          %v293 = vadd.f32 %v274, %v291
          %294 = vst.msk [vmem:[%s273] ss:$2 sm:$0x3] %vm271, %v293
        $region36: #{tpu_custom_call.1} parent=23 // pred_fallthru
          _
        // Predicated region
        $region37: #{tpu_custom_call.1} parent=23 // pred_check
          %p295 = pneg %p197
        $region38: #{tpu_custom_call.1} parent=23 // pred_check_branch
          %297 = sbr.rel (%p295) target = $region40
        $region39: #{tpu_custom_call.1} parent=23 // pred_region
          %s298 = scalar_lea.vmem %s161, 1 [#allocation5]
          %v299 = vld [vmem:[%s298] ss:$2 sm:$0x3]
          %v300 = vmul.f32 %v299, 0.25
          %v301 = vlaneseq
          %vm302 = vcmp.ge.s32.totalorder %v301, 0
          %vm303 = vcmp.lt.s32.totalorder %v301, 256
          %vm304 = vmand %vm302, %vm303
          %305 = vst.msk [vmem:[%s298] ss:$2 sm:$0x3] %vm304, %v300
        $region40: #{tpu_custom_call.1} parent=23 // pred_fallthru
          _
        %s306 = sand.u32 %s77, 1
        %s307 = scalar_lea.sflag [#allocation4], %s306
        %s308 = sand.u32 %s77, 1
        %s309 = smul.addr %s308, 4
        %s310 = scalar_lea.vmem [#allocation5], %s309
        // Predicated region
        $region41: #{tpu_custom_call.1} parent=23 // pred_check
          %p311 = pneg %p87
        $region42: #{tpu_custom_call.1} parent=23 // pred_check_branch
          %313 = sbr.rel (%p311) target = $region44
        $region43: #{tpu_custom_call.1} parent=23 // pred_region
          %s314 = smul.u32 2, %s24
          %s316 = ssub.s32 64, 64
          %317 = vsyncadd %s307, %s316
          %s318 = smul.addr %s23, 2
          %s319 = sadd.s32 %s314, %s318
          %s320 = smul.addr %s319, 32
          %s321 = scalar_lea.hbm %s1, %s320
          %s323 = sshll.u32 %s310, 4
          %s324 = int_to_ptr.vmem [resolvable:$true] %s323
          %326 = dma.vmem_to_hbm [thread:$0]  %s324, 64, %s321, %s307
        $region44: #{tpu_custom_call.1} parent=23 // pred_fallthru
          _
      $region24: #{tpu_custom_call.1} parent=5 // pred_fallthru
        _
      %p327 = scmp.le.s32.totalorder 2, %s13
      // Predicated region
      $region45: #{tpu_custom_call.1} parent=5 // pred_check
        %p328 = pneg %p327
      $region46: #{tpu_custom_call.1} parent=5 // pred_check_branch
        %330 = sbr.rel (%p328) target = $region48
      $region47: #{tpu_custom_call.1} parent=5 // pred_region
        %s331 = ssub.s32 %s13, 2
        // Predicated region
        $region49: #{tpu_custom_call.1} parent=47 // pred_check
          %p332 = pneg %p93
        $region50: #{tpu_custom_call.1} parent=47 // pred_check_branch
          %334 = sbr.rel (%p332) target = $region52
        $region51: #{tpu_custom_call.1} parent=47 // pred_region
          %s335 = sand.u32 %s78, 1
          %s336 = scalar_lea.sflag [#allocation4], %s335
          %s337 = sand.u32 %s78, 1
          %s338 = smul.addr %s337, 4
          %s339 = scalar_lea.vmem [#allocation5], %s338
          %340 = dma.done %s336, 64
        $region52: #{tpu_custom_call.1} parent=47 // pred_fallthru
          _
      $region48: #{tpu_custom_call.1} parent=5 // pred_fallthru
        _
    $region6: #{tpu_custom_call.1} parent=1 // loop_footer
      %s17 = sadd.s32 1, %s13
    $region7: #{tpu_custom_call.1} parent=1 // loop_footer_branch
      %12 = sbr.rel target = $region3
    $region8: #{tpu_custom_call.1} parent=1 // loop_exit
      _
    %341 = vsyncpa [#allocation3], 1
    %s342 = scalar_lea.sflag [#allocation3], 1
    %343 = vsyncpa %s342, 1
    %344 = vsyncpa [#allocation4], 1
    %s345 = scalar_lea.sflag [#allocation4], 1
    %346 = vsyncpa %s345, 1

</llo_original>
